<compile_context>
chip_gen: v7x
topology: tpu7x:2x2x1
jax: 0.10.0
libtpu: 0.0.40
codegen_flags: <defaults>
</compile_context>

<pallas_src>
import jax
import jax.numpy as jnp
from jax import lax
from jax.experimental import pallas as pl
from jax.experimental.pallas import tpu as pltpu


# ---------------------------- model hyper-params ----------------------------
N_NODES     = 16      # nodes in the (single) graph
F_IN        = 8       # raw input feature size
HIDDEN      = 32      # hidden_size
NUM_LAYERS  = 2       # num_layers (module default is 8; kept small for the demo)
NUM_HEADS   = 1       # num_heads (module default)
OUT_SIZE    = 4       # out_size
HEAD_DIM    = HIDDEN // NUM_HEADS
SCALING     = float(HEAD_DIM) ** -0.5   # folded into Wq/bq at packing time (host-side)
NEG_INF     = -1e30                     # Python float -> literal, not a captured constant
PRED_LANES  = 128                       # lane-dense predictor output width (sliced to OUT_SIZE)
BIAS_ROWS   = 2 + 3 * NUM_LAYERS        # b_in + (bq,bk,bv) per layer + b_pred


# ------------------------------- Pallas kernel ------------------------------
def gt_model_kernel(x_ref, w_in_ref, wqkv_ref, w_pred_ref, bias_ref, attn_bias_ref,
                    out_ref):
    f32, bf16 = jnp.float32, jnp.bfloat16

    # in_proj: (N, F_in) @ (F_in, D) + (1, D)   -- bf16 operands, f32 accumulate.
    h = jnp.dot(x_ref[...], w_in_ref[...],
                preferred_element_type=f32) + bias_ref[0:1, :HIDDEN]

    # f32 additive attention bias: 0 on edges, -1e30 elsewhere (loaded once, reused per layer).
    attn_bias = attn_bias_ref[...]                                  # (N, N)

    # Statically unrolled transformer layers (NUM_LAYERS is a Python constant).
    for l in range(NUM_LAYERS):
        h_bf = h.astype(bf16)
        wrow = 3 * l          # weight-slab row base for this layer
        brow = 1 + 3 * l      # bias-slab   row base for this layer

        # Three separate (D, D) projections (each one MXU pass at these shapes); weights are
        # indexed on the leading dim, so no non-tile-aligned lane slicing.
        q = jnp.dot(h_bf, wqkv_ref[wrow + 0],
                    preferred_element_type=f32) + bias_ref[brow + 0:brow + 1, :HIDDEN]
        k = jnp.dot(h_bf, wqkv_ref[wrow + 1],
                    preferred_element_type=f32) + bias_ref[brow + 1:brow + 2, :HIDDEN]
        v = jnp.dot(h_bf, wqkv_ref[wrow + 2],
                    preferred_element_type=f32) + bias_ref[brow + 2:brow + 3, :HIDDEN]
        # (head-dim scaling is already folded into the Q weights/bias on the host)

        # SDDMM restricted to edges: contract last dims (no k.T copy), additive edge mask.
        scores = lax.dot_general(q.astype(bf16), k.astype(bf16),
                                 (((1,), (1,)), ((), ())),
                                 preferred_element_type=f32) + attn_bias   # (N, N)

        # Sparse (per-neighbor) softmax == dense masked softmax (every row has >=1 edge).
        m = jnp.max(scores, axis=-1, keepdims=True)
        e = jnp.exp(scores - m)
        denom = jnp.sum(e, axis=-1, keepdims=True)
        attn = e * pl.reciprocal(denom, approx=True)                # EUP vrcp slot

        # SpMM aggregation: h_i = sum_j attn[i, j] * v_j
        h = jnp.dot(attn.astype(bf16), v.astype(bf16), preferred_element_type=f32)

    # SumPooling over the single graph, then predictor Linear (lane-dense (1, 128) store;
    # padding columns of w_pred / b_pred are zero and get sliced off in the wrapper).
    pooled = jnp.sum(h, axis=0, keepdims=True)                      # (1, D)
    b_pred = bias_ref[1 + 3 * NUM_LAYERS:2 + 3 * NUM_LAYERS, :]     # (1, 128)
    out_ref[...] = jnp.dot(pooled.astype(jnp.bfloat16), w_pred_ref[...],
                           preferred_element_type=f32) + b_pred


def pack_kernel_params(params):
    """Host-side, one-time packing: bf16 weight slabs, one f32 bias slab, attn-scale folding."""
    (w_in, b_in, wq, bq, wk, bk, wv, bv, w_pred, b_pred) = params
    bf16, f32 = jnp.bfloat16, jnp.float32

    # bf16 weight slabs (kernel never converts weights).
    w_in_bf = w_in.astype(bf16)                                        # (F_in, D)
    wqkv = jnp.stack([wq * SCALING, wk, wv], axis=1)                   # (L, 3, D, D)
    wqkv_bf = wqkv.reshape(NUM_LAYERS * 3, HIDDEN, HIDDEN).astype(bf16)
    w_pred_pad = jnp.zeros((HIDDEN, PRED_LANES), f32).at[:, :OUT_SIZE].set(w_pred)
    w_pred_bf = w_pred_pad.astype(bf16)                                # (D, 128), lane-dense

    # Single f32 bias slab: one bias vector per row, zero-padded to 128 lanes.
    bias = jnp.zeros((BIAS_ROWS, PRED_LANES), f32)
    bias = bias.at[0, :HIDDEN].set(b_in[0])
    for l in range(NUM_LAYERS):
        bias = bias.at[1 + 3 * l + 0, :HIDDEN].set(bq[l, 0] * SCALING)
        bias = bias.at[1 + 3 * l + 1, :HIDDEN].set(bk[l, 0])
        bias = bias.at[1 + 3 * l + 2, :HIDDEN].set(bv[l, 0])
    bias = bias.at[1 + 3 * NUM_LAYERS, :OUT_SIZE].set(b_pred[0])

    return (w_in_bf, wqkv_bf, w_pred_bf, bias)


def gt_model_forward(x, kernel_params, attn_bias_f32):
    (w_in_bf, wqkv_bf, w_pred_bf, bias) = kernel_params
    vmem = pl.BlockSpec(memory_space=pltpu.MemorySpace.VMEM)
    out_full = pl.pallas_call(
        gt_model_kernel,
        out_shape=jax.ShapeDtypeStruct((1, PRED_LANES), jnp.float32),
        in_specs=[vmem] * 6,
        out_specs=vmem,
    )(x.astype(jnp.bfloat16), w_in_bf, wqkv_bf, w_pred_bf, bias, attn_bias_f32)
    return out_full[:, :OUT_SIZE]


# ------------------------------ pure-JAX reference ---------------------------
def gt_model_reference(x, params, mask):
    (w_in, b_in, wq, bq, wk, bk, wv, bv, w_pred, b_pred) = params
    h = x @ w_in + b_in
    edge = mask > 0.0
    for l in range(NUM_LAYERS):
        q = (h @ wq[l] + bq[l]) * SCALING
        k = h @ wk[l] + bk[l]
        v = h @ wv[l] + bv[l]
        s = jnp.where(edge, q @ k.T, -1e30)
        s = s - jnp.max(s, axis=-1, keepdims=True)
        e = jnp.exp(s)
        attn = e / jnp.sum(e, axis=-1, keepdims=True)
        h = attn @ v
    pooled = jnp.sum(h, axis=0, keepdims=True)
    return pooled @ w_pred + b_pred


# ----------------------------------- main ------------------------------------
if __name__ == "__main__":
    key = jax.random.PRNGKey(0)
    keys = jax.random.split(key, 16)

    # Deterministic parameter init (Linear-like: small normal weights, zero-ish biases).
    w_in   = jax.random.normal(keys[0], (F_IN, HIDDEN),  jnp.float32) * 0.1
    b_in   = jax.random.normal(keys[1], (1, HIDDEN),     jnp.float32) * 0.01
    wq     = jax.random.normal(keys[2], (NUM_LAYERS, HIDDEN, HIDDEN), jnp.float32) * 0.1
    bq     = jax.random.normal(keys[3], (NUM_LAYERS, 1, HIDDEN),      jnp.float32) * 0.01
    wk     = jax.random.normal(keys[4], (NUM_LAYERS, HIDDEN, HIDDEN), jnp.float32) * 0.1
    bk     = jax.random.normal(keys[5], (NUM_LAYERS, 1, HIDDEN),      jnp.float32) * 0.01
    wv     = jax.random.normal(keys[6], (NUM_LAYERS, HIDDEN, HIDDEN), jnp.float32) * 0.1
    bv     = jax.random.normal(keys[7], (NUM_LAYERS, 1, HIDDEN),      jnp.float32) * 0.01
    w_pred = jax.random.normal(keys[8], (HIDDEN, OUT_SIZE), jnp.float32) * 0.1
    b_pred = jax.random.normal(keys[9], (1, OUT_SIZE),      jnp.float32) * 0.01
    params = (w_in, b_in, wq, bq, wk, bk, wv, bv, w_pred, b_pred)

    # Node features.
    x = jax.random.normal(keys[10], (N_NODES, F_IN), jnp.float32)

    # Synthetic graph: random sparse adjacency + self-loops (every row has >=1 edge, so the
    # dense masked softmax equals dgl's sparse softmax over nonzeros).
    adj_rand = (jax.random.uniform(keys[11], (N_NODES, N_NODES)) < 0.25).astype(jnp.float32)
    mask_f32 = jnp.clip(adj_rand + jnp.eye(N_NODES, dtype=jnp.float32), 0.0, 1.0)
    assert bool(jnp.all(jnp.sum(mask_f32, axis=-1) > 0)), "every node needs >=1 edge"

    # f32 additive attention bias shipped to the kernel (0 on edges, NEG_INF elsewhere).
    attn_bias_f32 = jnp.where(mask_f32 > 0.0, 0.0, NEG_INF).astype(jnp.float32)

    kernel_params = pack_kernel_params(params)

    out = gt_model_forward(x, kernel_params, attn_bias_f32)
    out = jax.block_until_ready(out)

    ref = gt_model_reference(x, params, mask_f32)
    assert out.shape == (1, OUT_SIZE)
    assert bool(jnp.all(jnp.isfinite(out))), out
    # bf16 matmul operands + approx reciprocal => compare against the f32 reference with a
    # correspondingly looser (but still meaningful) tolerance.
    assert jnp.allclose(out, ref, atol=5e-2, rtol=5e-2), (out, ref)

    print("KERNEL_OK")
</pallas_src>

<mosaic_0001>
module attributes {stable_mosaic.version = 11 : i64} {
  func.func @gt_model_kernel(%arg0: memref<16x8xbf16, #tpu.memory_space<vmem>>, %arg1: memref<8x32xbf16, #tpu.memory_space<vmem>>, %arg2: memref<6x32x32xbf16, #tpu.memory_space<vmem>>, %arg3: memref<32x128xbf16, #tpu.memory_space<vmem>>, %arg4: memref<8x128xf32, #tpu.memory_space<vmem>>, %arg5: memref<16x16xf32, #tpu.memory_space<vmem>>, %arg6: memref<1x128xf32, #tpu.memory_space<vmem>>) attributes {dimension_semantics = [], scalar_prefetch = 0 : i64, scratch_operands = 0 : i64, tpu.core_type = #tpu.core_type<tc>} {
    %c0 = arith.constant 0 : index
    %c0_0 = arith.constant 0 : index
    %0 = vector.load %arg0[%c0, %c0_0] : memref<16x8xbf16, #tpu.memory_space<vmem>>, vector<16x8xbf16>
    %c0_1 = arith.constant 0 : index
    %c0_2 = arith.constant 0 : index
    %1 = vector.load %arg1[%c0_1, %c0_2] : memref<8x32xbf16, #tpu.memory_space<vmem>>, vector<8x32xbf16>
    %cst = arith.constant dense<0.000000e+00> : vector<16x32xf32>
    %2 = tpu.matmul %0, %1, %cst {dimension_numbers = #tpu.dot_dimension_numbers<[1], [0], [0], [1], [0, 0, 1, 1], [], []>} : vector<16x8xbf16>, vector<8x32xbf16>, vector<16x32xf32> -> vector<16x32xf32>
    %c0_3 = arith.constant 0 : index
    %c0_4 = arith.constant 0 : index
    %3 = vector.load %arg4[%c0_3, %c0_4] : memref<8x128xf32, #tpu.memory_space<vmem>>, vector<1x32xf32>
    %4 = vector.broadcast %3 : vector<1x32xf32> to vector<16x32xf32>
    %5 = arith.addf %2, %4 : vector<16x32xf32>
    %c0_5 = arith.constant 0 : index
    %c0_6 = arith.constant 0 : index
    %6 = vector.load %arg5[%c0_5, %c0_6] : memref<16x16xf32, #tpu.memory_space<vmem>>, vector<16x16xf32>
    %7 = arith.truncf %5 : vector<16x32xf32> to vector<16x32xbf16>
    %c0_7 = arith.constant 0 : index
    %c0_8 = arith.constant 0 : index
    %c0_9 = arith.constant 0 : index
    %8 = vector.load %arg2[%c0_7, %c0_8, %c0_9] : memref<6x32x32xbf16, #tpu.memory_space<vmem>>, vector<1x32x32xbf16>
    %9 = vector.shape_cast %8 : vector<1x32x32xbf16> to vector<32x32xbf16>
    %cst_10 = arith.constant dense<0.000000e+00> : vector<16x32xf32>
    %10 = tpu.matmul %7, %9, %cst_10 {dimension_numbers = #tpu.dot_dimension_numbers<[1], [0], [0], [1], [0, 0, 1, 1], [], []>} : vector<16x32xbf16>, vector<32x32xbf16>, vector<16x32xf32> -> vector<16x32xf32>
    %c1 = arith.constant 1 : index
    %c0_11 = arith.constant 0 : index
    %11 = vector.load %arg4[%c1, %c0_11] : memref<8x128xf32, #tpu.memory_space<vmem>>, vector<1x32xf32>
    %12 = vector.broadcast %11 : vector<1x32xf32> to vector<16x32xf32>
    %13 = arith.addf %10, %12 : vector<16x32xf32>
    %c1_12 = arith.constant 1 : index
    %c0_13 = arith.constant 0 : index
    %c0_14 = arith.constant 0 : index
    %14 = vector.load %arg2[%c1_12, %c0_13, %c0_14] : memref<6x32x32xbf16, #tpu.memory_space<vmem>>, vector<1x32x32xbf16>
    %15 = vector.shape_cast %14 : vector<1x32x32xbf16> to vector<32x32xbf16>
    %cst_15 = arith.constant dense<0.000000e+00> : vector<16x32xf32>
    %16 = tpu.matmul %7, %15, %cst_15 {dimension_numbers = #tpu.dot_dimension_numbers<[1], [0], [0], [1], [0, 0, 1, 1], [], []>} : vector<16x32xbf16>, vector<32x32xbf16>, vector<16x32xf32> -> vector<16x32xf32>
    %c2 = arith.constant 2 : index
    %c0_16 = arith.constant 0 : index
    %17 = vector.load %arg4[%c2, %c0_16] : memref<8x128xf32, #tpu.memory_space<vmem>>, vector<1x32xf32>
    %18 = vector.broadcast %17 : vector<1x32xf32> to vector<16x32xf32>
    %19 = arith.addf %16, %18 : vector<16x32xf32>
    %c2_17 = arith.constant 2 : index
    %c0_18 = arith.constant 0 : index
    %c0_19 = arith.constant 0 : index
    %20 = vector.load %arg2[%c2_17, %c0_18, %c0_19] : memref<6x32x32xbf16, #tpu.memory_space<vmem>>, vector<1x32x32xbf16>
    %21 = vector.shape_cast %20 : vector<1x32x32xbf16> to vector<32x32xbf16>
    %cst_20 = arith.constant dense<0.000000e+00> : vector<16x32xf32>
    %22 = tpu.matmul %7, %21, %cst_20 {dimension_numbers = #tpu.dot_dimension_numbers<[1], [0], [0], [1], [0, 0, 1, 1], [], []>} : vector<16x32xbf16>, vector<32x32xbf16>, vector<16x32xf32> -> vector<16x32xf32>
    %c3 = arith.constant 3 : index
    %c0_21 = arith.constant 0 : index
    %23 = vector.load %arg4[%c3, %c0_21] : memref<8x128xf32, #tpu.memory_space<vmem>>, vector<1x32xf32>
    %24 = vector.broadcast %23 : vector<1x32xf32> to vector<16x32xf32>
    %25 = arith.addf %22, %24 : vector<16x32xf32>
    %26 = arith.truncf %13 : vector<16x32xf32> to vector<16x32xbf16>
    %27 = arith.truncf %19 : vector<16x32xf32> to vector<16x32xbf16>
    %cst_22 = arith.constant dense<0.000000e+00> : vector<16x16xf32>
    %28 = tpu.matmul %26, %27, %cst_22 {dimension_numbers = #tpu.dot_dimension_numbers<[1], [1], [0], [0], [0, 0, 1, 0], [], []>} : vector<16x32xbf16>, vector<16x32xbf16>, vector<16x16xf32> -> vector<16x16xf32>
    %29 = arith.addf %28, %6 : vector<16x16xf32>
    %cst_23 = arith.constant dense<0xFF800000> : vector<16xf32>
    %30 = vector.multi_reduction <maximumf>, %29, %cst_23 [1] : vector<16x16xf32> to vector<16xf32>
    %31 = vector.shape_cast %30 : vector<16xf32> to vector<16x1xf32>
    %32 = vector.broadcast %31 : vector<16x1xf32> to vector<16x16xf32>
    %33 = arith.subf %29, %32 : vector<16x16xf32>
    %34 = math.exp %33 : vector<16x16xf32>
    %cst_24 = arith.constant dense<0.000000e+00> : vector<16xf32>
    %35 = vector.multi_reduction <add>, %34, %cst_24 [1] : vector<16x16xf32> to vector<16xf32>
    %36 = vector.shape_cast %35 : vector<16xf32> to vector<16x1xf32>
    %37 = tpu.reciprocal %36 {approx = true} : vector<16x1xf32> -> vector<16x1xf32>
    %38 = vector.broadcast %37 : vector<16x1xf32> to vector<16x16xf32>
    %39 = arith.mulf %34, %38 : vector<16x16xf32>
    %40 = arith.truncf %39 : vector<16x16xf32> to vector<16x16xbf16>
    %41 = arith.truncf %25 : vector<16x32xf32> to vector<16x32xbf16>
    %cst_25 = arith.constant dense<0.000000e+00> : vector<16x32xf32>
    %42 = tpu.matmul %40, %41, %cst_25 {dimension_numbers = #tpu.dot_dimension_numbers<[1], [0], [0], [1], [0, 0, 1, 1], [], []>} : vector<16x16xbf16>, vector<16x32xbf16>, vector<16x32xf32> -> vector<16x32xf32>
    %43 = arith.truncf %42 : vector<16x32xf32> to vector<16x32xbf16>
    %c3_26 = arith.constant 3 : index
    %c0_27 = arith.constant 0 : index
    %c0_28 = arith.constant 0 : index
    %44 = vector.load %arg2[%c3_26, %c0_27, %c0_28] : memref<6x32x32xbf16, #tpu.memory_space<vmem>>, vector<1x32x32xbf16>
    %45 = vector.shape_cast %44 : vector<1x32x32xbf16> to vector<32x32xbf16>
    %cst_29 = arith.constant dense<0.000000e+00> : vector<16x32xf32>
    %46 = tpu.matmul %43, %45, %cst_29 {dimension_numbers = #tpu.dot_dimension_numbers<[1], [0], [0], [1], [0, 0, 1, 1], [], []>} : vector<16x32xbf16>, vector<32x32xbf16>, vector<16x32xf32> -> vector<16x32xf32>
    %c4 = arith.constant 4 : index
    %c0_30 = arith.constant 0 : index
    %47 = vector.load %arg4[%c4, %c0_30] : memref<8x128xf32, #tpu.memory_space<vmem>>, vector<1x32xf32>
    %48 = vector.broadcast %47 : vector<1x32xf32> to vector<16x32xf32>
    %49 = arith.addf %46, %48 : vector<16x32xf32>
    %c4_31 = arith.constant 4 : index
    %c0_32 = arith.constant 0 : index
    %c0_33 = arith.constant 0 : index
    %50 = vector.load %arg2[%c4_31, %c0_32, %c0_33] : memref<6x32x32xbf16, #tpu.memory_space<vmem>>, vector<1x32x32xbf16>
    %51 = vector.shape_cast %50 : vector<1x32x32xbf16> to vector<32x32xbf16>
    %cst_34 = arith.constant dense<0.000000e+00> : vector<16x32xf32>
    %52 = tpu.matmul %43, %51, %cst_34 {dimension_numbers = #tpu.dot_dimension_numbers<[1], [0], [0], [1], [0, 0, 1, 1], [], []>} : vector<16x32xbf16>, vector<32x32xbf16>, vector<16x32xf32> -> vector<16x32xf32>
    %c5 = arith.constant 5 : index
    %c0_35 = arith.constant 0 : index
    %53 = vector.load %arg4[%c5, %c0_35] : memref<8x128xf32, #tpu.memory_space<vmem>>, vector<1x32xf32>
    %54 = vector.broadcast %53 : vector<1x32xf32> to vector<16x32xf32>
    %55 = arith.addf %52, %54 : vector<16x32xf32>
    %c5_36 = arith.constant 5 : index
    %c0_37 = arith.constant 0 : index
    %c0_38 = arith.constant 0 : index
    %56 = vector.load %arg2[%c5_36, %c0_37, %c0_38] : memref<6x32x32xbf16, #tpu.memory_space<vmem>>, vector<1x32x32xbf16>
    %57 = vector.shape_cast %56 : vector<1x32x32xbf16> to vector<32x32xbf16>
    %cst_39 = arith.constant dense<0.000000e+00> : vector<16x32xf32>
    %58 = tpu.matmul %43, %57, %cst_39 {dimension_numbers = #tpu.dot_dimension_numbers<[1], [0], [0], [1], [0, 0, 1, 1], [], []>} : vector<16x32xbf16>, vector<32x32xbf16>, vector<16x32xf32> -> vector<16x32xf32>
    %c6 = arith.constant 6 : index
    %c0_40 = arith.constant 0 : index
    %59 = vector.load %arg4[%c6, %c0_40] : memref<8x128xf32, #tpu.memory_space<vmem>>, vector<1x32xf32>
    %60 = vector.broadcast %59 : vector<1x32xf32> to vector<16x32xf32>
    %61 = arith.addf %58, %60 : vector<16x32xf32>
    %62 = arith.truncf %49 : vector<16x32xf32> to vector<16x32xbf16>
    %63 = arith.truncf %55 : vector<16x32xf32> to vector<16x32xbf16>
    %cst_41 = arith.constant dense<0.000000e+00> : vector<16x16xf32>
    %64 = tpu.matmul %62, %63, %cst_41 {dimension_numbers = #tpu.dot_dimension_numbers<[1], [1], [0], [0], [0, 0, 1, 0], [], []>} : vector<16x32xbf16>, vector<16x32xbf16>, vector<16x16xf32> -> vector<16x16xf32>
    %65 = arith.addf %64, %6 : vector<16x16xf32>
    %cst_42 = arith.constant dense<0xFF800000> : vector<16xf32>
    %66 = vector.multi_reduction <maximumf>, %65, %cst_42 [1] : vector<16x16xf32> to vector<16xf32>
    %67 = vector.shape_cast %66 : vector<16xf32> to vector<16x1xf32>
    %68 = vector.broadcast %67 : vector<16x1xf32> to vector<16x16xf32>
    %69 = arith.subf %65, %68 : vector<16x16xf32>
    %70 = math.exp %69 : vector<16x16xf32>
    %cst_43 = arith.constant dense<0.000000e+00> : vector<16xf32>
    %71 = vector.multi_reduction <add>, %70, %cst_43 [1] : vector<16x16xf32> to vector<16xf32>
    %72 = vector.shape_cast %71 : vector<16xf32> to vector<16x1xf32>
    %73 = tpu.reciprocal %72 {approx = true} : vector<16x1xf32> -> vector<16x1xf32>
    %74 = vector.broadcast %73 : vector<16x1xf32> to vector<16x16xf32>
    %75 = arith.mulf %70, %74 : vector<16x16xf32>
    %76 = arith.truncf %75 : vector<16x16xf32> to vector<16x16xbf16>
    %77 = arith.truncf %61 : vector<16x32xf32> to vector<16x32xbf16>
    %cst_44 = arith.constant dense<0.000000e+00> : vector<16x32xf32>
    %78 = tpu.matmul %76, %77, %cst_44 {dimension_numbers = #tpu.dot_dimension_numbers<[1], [0], [0], [1], [0, 0, 1, 1], [], []>} : vector<16x16xbf16>, vector<16x32xbf16>, vector<16x32xf32> -> vector<16x32xf32>
    %cst_45 = arith.constant dense<0.000000e+00> : vector<32xf32>
    %79 = vector.multi_reduction <add>, %78, %cst_45 [0] : vector<16x32xf32> to vector<32xf32>
    %80 = vector.shape_cast %79 : vector<32xf32> to vector<1x32xf32>
    %c7 = arith.constant 7 : index
    %c0_46 = arith.constant 0 : index
    %81 = vector.load %arg4[%c7, %c0_46] : memref<8x128xf32, #tpu.memory_space<vmem>>, vector<1x128xf32>
    %82 = arith.truncf %80 : vector<1x32xf32> to vector<1x32xbf16>
    %c0_47 = arith.constant 0 : index
    %c0_48 = arith.constant 0 : index
    %83 = vector.load %arg3[%c0_47, %c0_48] : memref<32x128xbf16, #tpu.memory_space<vmem>>, vector<32x128xbf16>
    %cst_49 = arith.constant dense<0.000000e+00> : vector<1x128xf32>
    %84 = tpu.matmul %82, %83, %cst_49 {dimension_numbers = #tpu.dot_dimension_numbers<[1], [0], [0], [1], [0, 0, 1, 1], [], []>} : vector<1x32xbf16>, vector<32x128xbf16>, vector<1x128xf32> -> vector<1x128xf32>
    %85 = arith.addf %84, %81 : vector<1x128xf32>
    %c0_50 = arith.constant 0 : index
    %c0_51 = arith.constant 0 : index
    %86 = vector.load %arg6[%c0_50, %c0_51] : memref<1x128xf32, #tpu.memory_space<vmem>>, vector<1x128xf32>
    tpu.vector_store %arg6[%c0_50, %c0_51], %85 {strides = array<i32>} : memref<1x128xf32, #tpu.memory_space<vmem>>, vector<1x128xf32>,
    return
  }
}

</mosaic_0001>

<llo_original>
// kernel: tpu_custom_call.1
$region0: #{tpu_custom_call.1}
  #allocation0 [shape = 'u32[]', space=smem, size = 0x4, offset = 0x4, fixed_abs, tag = 'smem constant byte address 0x4 - core index']
  #allocation1 [shape = 'u32[144,128]{1,0:T(1,128)}', space=vmem, size = 0x12000, scoped, tag = 'internal scratch']
  %s0 = inlined_call_operand.vmem [shape: bf16[16,8], index: 0, kind: input, shape index: {}]
  %s1 = inlined_call_operand.hbm [shape: bf16[8,32], index: 1, kind: input, shape index: {}]
  %s2 = inlined_call_operand.hbm [shape: bf16[6,32,32], index: 2, kind: input, shape index: {}]
  %s3 = inlined_call_operand.vmem [shape: bf16[32,128], index: 3, kind: input, shape index: {}]
  %s4 = inlined_call_operand.vmem [shape: f32[8,128], index: 4, kind: input, shape index: {}]
  %s5 = inlined_call_operand.hbm [shape: f32[16,16], index: 5, kind: input, shape index: {}]
  %s6 = inlined_call_operand.hbm [shape: f32[1,128], index: 6, kind: output, shape index: {}]
  %s7 = sld [smem:[#allocation0]]
  $region46: #{tpu_custom_call.1} parent=0
    _
  %s9 = ssub.s32 1, %s7
  %s10 = scalar_select 0, %s9, %s7
  $region1: #{tpu_custom_call.1} parent=0
    #allocation2 [shape = 'u8[2048]{0}', space=vmem, size = 0x800, scoped, tag = 'input window, operand 1, single buffered']
    #allocation3 [shape = 's32[1]{0}', space=sflag, size = 0x4, scoped, tag = 'scoped memory for tpu_custom_call.1']
    #allocation4 [shape = 's32[1]{0}', space=sflag, size = 0x4, scoped, tag = 'scoped memory for tpu_custom_call.1']
    #allocation5 [shape = 'u8[49152]{0}', space=vmem, size = 0xc000, scoped, tag = 'input window, operand 2, single buffered']
    #allocation6 [shape = 's32[1]{0}', space=sflag, size = 0x4, scoped, tag = 'scoped memory for tpu_custom_call.1']
    #allocation7 [shape = 'u8[8192]{0}', space=vmem, size = 0x2000, scoped, tag = 'input window, operand 5, single buffered']
    #allocation8 [shape = 'u8[512]{0}', space=vmem, size = 0x400, scoped, tag = 'output window, operand 0, single buffered']
    %11 = vsyncpa [#allocation3], 0
    %12 = vsyncpa [#allocation6], 0
    %13 = vsyncpa [#allocation4], 0
    // Predicated region
    $region2: #{tpu_custom_call.1} parent=1 // pred_check
      _
    $region3: #{tpu_custom_call.1} parent=1 // pred_check_branch
      %15 = sbr.rel (0) target = $region5
    $region4: #{tpu_custom_call.1} parent=1 // pred_region
      _
    $region5: #{tpu_custom_call.1} parent=1 // pred_fallthru
      _
    // Predicated region
    $region6: #{tpu_custom_call.1} parent=1 // pred_check
      _
    $region7: #{tpu_custom_call.1} parent=1 // pred_check_branch
      %17 = sbr.rel (0) target = $region9
    $region8: #{tpu_custom_call.1} parent=1 // pred_region
      %s19 = ssub.s32 64, 64
      %20 = vsyncadd [#allocation3], %s19
      %s22 = sshll.u32 [#allocation2], 4
      %s23 = int_to_ptr.vmem [resolvable:$true] %s22
      %25 = dma.hbm_to_vmem [thread:$0]  %s1, 64, %s23, [#allocation3]
    $region9: #{tpu_custom_call.1} parent=1 // pred_fallthru
      _
    // Predicated region
    $region10: #{tpu_custom_call.1} parent=1 // pred_check
      _
    $region11: #{tpu_custom_call.1} parent=1 // pred_check_branch
      %27 = sbr.rel (0) target = $region13
    $region12: #{tpu_custom_call.1} parent=1 // pred_region
      %s29 = ssub.s32 1536, 1536
      %30 = vsyncadd [#allocation6], %s29
      %s31 = sshll.u32 [#allocation5], 4
      %s32 = int_to_ptr.vmem [resolvable:$true] %s31
      %37 = dma.hbm_to_vmem [thread:$0]  %s2, 1536, %s32, [#allocation6], 64, 64, 4
    $region13: #{tpu_custom_call.1} parent=1 // pred_fallthru
      _
    // Predicated region
    $region14: #{tpu_custom_call.1} parent=1 // pred_check
      _
    $region15: #{tpu_custom_call.1} parent=1 // pred_check_branch
      %39 = sbr.rel (0) target = $region17
    $region16: #{tpu_custom_call.1} parent=1 // pred_region
      _
    $region17: #{tpu_custom_call.1} parent=1 // pred_fallthru
      _
    // Predicated region
    $region18: #{tpu_custom_call.1} parent=1 // pred_check
      _
    $region19: #{tpu_custom_call.1} parent=1 // pred_check_branch
      %41 = sbr.rel (0) target = $region21
    $region20: #{tpu_custom_call.1} parent=1 // pred_region
      _
    $region21: #{tpu_custom_call.1} parent=1 // pred_fallthru
      _
    // Predicated region
    $region22: #{tpu_custom_call.1} parent=1 // pred_check
      _
    $region23: #{tpu_custom_call.1} parent=1 // pred_check_branch
      %43 = sbr.rel (0) target = $region25
    $region24: #{tpu_custom_call.1} parent=1 // pred_region
      %s45 = ssub.s32 256, 256
      %46 = vsyncadd [#allocation6], %s45
      %s47 = sshll.u32 [#allocation7], 4
      %s48 = int_to_ptr.vmem [resolvable:$true] %s47
      %53 = dma.hbm_to_vmem [thread:$0]  %s5, 256, %s48, [#allocation6], 128, 128, 8
    $region25: #{tpu_custom_call.1} parent=1 // pred_fallthru
      _
    // Predicated region
    $region26: #{tpu_custom_call.1} parent=1 // pred_check
      _
    $region27: #{tpu_custom_call.1} parent=1 // pred_check_branch
      %55 = sbr.rel (0) target = $region29
    $region28: #{tpu_custom_call.1} parent=1 // pred_region
      %56 = dma.done [#allocation3], 64
    $region29: #{tpu_custom_call.1} parent=1 // pred_fallthru
      _
    // Predicated region
    $region30: #{tpu_custom_call.1} parent=1 // pred_check
      _
    $region31: #{tpu_custom_call.1} parent=1 // pred_check_branch
      %58 = sbr.rel (0) target = $region33
    $region32: #{tpu_custom_call.1} parent=1 // pred_region
      %59 = dma.done [#allocation6], 1536
    $region33: #{tpu_custom_call.1} parent=1 // pred_fallthru
      _
    // Predicated region
    $region34: #{tpu_custom_call.1} parent=1 // pred_check
      _
    $region35: #{tpu_custom_call.1} parent=1 // pred_check_branch
      %61 = sbr.rel (0) target = $region37
    $region36: #{tpu_custom_call.1} parent=1 // pred_region
      %62 = dma.done [#allocation6], 256
    $region37: #{tpu_custom_call.1} parent=1 // pred_fallthru
      _
    %v64 = vld [vmem:[%s0] sm:$0xf]
    %v65 = vld [vmem:[%s0 + $0x4] sm:$0xf]
    %v66 = vld [vmem:[#allocation2] sm:$0xf]
    %v67 = vld [vmem:[%s4] sm:$0x1]
    %v68 = vlaneseq
    %v69 = vshrl.u32 %v68, 7
    %v70 = vsub.s32 0, %v69
    %v71 = vrot.slane %v67, %v70
    %v74 = vunpack.c.l.b16 %v64
    %v75 = vunpack.c.l.b16 %v65
    %v76 = vpack.c.b16 %v75, %v74
    %vm77 = vcmask 64512
    %v79 = vsel %vm77, %v76, 0
    %vm81 = vcmask 1043456
    %v83 = vsel %vm81, %v66, 0
    %85 = vmatprep.subr.bf16.mxu0 0
    %86 = vmatpush1.bf16.msra.mxu0 %v83
    %87 = vmatprep.subr.bf16.mxu0 0
    %88 = vmatpush1.bf16.msra.mxu0 0
    %89 = vmatprep.subr.bf16.mxu0 0
    %90 = vmatpush1.bf16.msra.mxu0 0
    %91 = vmatprep.subr.bf16.mxu0 0
    %92 = vmatpush1.bf16.msra.mxu0 0
    %93 = vmatprep.subr.bf16.mxu0 0
    %94 = vmatpush1.bf16.msra.mxu0 0
    %95 = vmatprep.subr.bf16.mxu0 0
    %96 = vmatpush1.bf16.msra.mxu0 0
    %97 = vmatprep.subr.bf16.mxu0 0
    %98 = vmatpush1.bf16.msra.mxu0 0
    %99 = vmatprep.subr.bf16.mxu0 0
    %100 = vmatpush1.bf16.msra.mxu0 0
    %101 = vmatprep.subr.bf16.mxu0 0
    %102 = vmatpush1.bf16.msra.mxu0 0
    %103 = vmatprep.subr.bf16.mxu0 0
    %104 = vmatpush1.bf16.msra.mxu0 0
    %105 = vmatprep.subr.bf16.mxu0 0
    %106 = vmatpush1.bf16.msra.mxu0 0
    %107 = vmatprep.subr.bf16.mxu0 0
    %108 = vmatpush1.bf16.msra.mxu0 0
    %109 = vmatprep.subr.bf16.mxu0 0
    %110 = vmatpush1.bf16.msra.mxu0 0
    %111 = vmatprep.subr.bf16.mxu0 0
    %112 = vmatpush1.bf16.msra.mxu0 0
    %113 = vmatprep.subr.bf16.mxu0 0
    %114 = vmatpush1.bf16.msra.mxu0 0
    %115 = vmatprep.subr.bf16.mxu0 0
    %116 = vmatpush1.bf16.msra.mxu0 0
    %117 = vmatprep.mubr.bf16.mxu0 0
    %118 = vmatmul.mubr.bf16.gmra.mrb[0].mxu0 %v79
    %v119 = vpop.f32.mrb[0].mxu0
    %v120 = vadd.f32 %v71, %v119
    %v121 = vpop.f32.mrb[0].mxu0
    %v122 = vpop.f32.mrb[0].mxu0
    %v123 = vadd.f32 %v71, %v122
    %v124 = vpop.f32.mrb[0].mxu0
    %125 = vdwg.mxu0
    %v126 = vld [vmem:[#allocation7] sm:$0xff]
    %v127 = vld [vmem:[#allocation7 + $0x8] sm:$0xff]
    %v128 = vpack.c.bf16 %v123, %v120
    %v129 = vld [vmem:[#allocation5] sm:$0xf]
    %v130 = vld [vmem:[#allocation5 + $0x4] sm:$0xf]
    %v131 = vld [vmem:[#allocation5 + $0x8] sm:$0xf]
    %v132 = vld [vmem:[#allocation5 + $0xc] sm:$0xf]
    %v133 = vld [vmem:[%s4 + $0x1] sm:$0x1]
    %v134 = vlaneseq
    %v135 = vshrl.u32 %v134, 7
    %v136 = vsub.s32 0, %v135
    %v137 = vrot.slane %v133, %v136
    %v142 = vunpack.c.l.b16 %v129
    %v143 = vunpack.c.l.b16 %v130
    %v144 = vunpack.c.l.b16 %v131
    %v145 = vunpack.c.l.b16 %v132
    %v146 = vpack.c.b16 %v143, %v142
    %v147 = vpack.c.b16 %v145, %v144
    %vm150 = vcmask 261120
    %v152 = vsel %vm150, %v128, 0
    %154 = vmatprep.subr.bf16.mxu0 0
    %155 = vmatpush1.bf16.msra.mxu0 %v146
    %156 = vmatprep.subr.bf16.mxu0 0
    %157 = vmatpush1.bf16.msra.mxu0 %v147
    %158 = vmatprep.subr.bf16.mxu0 0
    %159 = vmatpush1.bf16.msra.mxu0 0
    %160 = vmatprep.subr.bf16.mxu0 0
    %161 = vmatpush1.bf16.msra.mxu0 0
    %162 = vmatprep.subr.bf16.mxu0 0
    %163 = vmatpush1.bf16.msra.mxu0 0
    %164 = vmatprep.subr.bf16.mxu0 0
    %165 = vmatpush1.bf16.msra.mxu0 0
    %166 = vmatprep.subr.bf16.mxu0 0
    %167 = vmatpush1.bf16.msra.mxu0 0
    %168 = vmatprep.subr.bf16.mxu0 0
    %169 = vmatpush1.bf16.msra.mxu0 0
    %170 = vmatprep.subr.bf16.mxu0 0
    %171 = vmatpush1.bf16.msra.mxu0 0
    %172 = vmatprep.subr.bf16.mxu0 0
    %173 = vmatpush1.bf16.msra.mxu0 0
    %174 = vmatprep.subr.bf16.mxu0 0
    %175 = vmatpush1.bf16.msra.mxu0 0
    %176 = vmatprep.subr.bf16.mxu0 0
    %177 = vmatpush1.bf16.msra.mxu0 0
    %178 = vmatprep.subr.bf16.mxu0 0
    %179 = vmatpush1.bf16.msra.mxu0 0
    %180 = vmatprep.subr.bf16.mxu0 0
    %181 = vmatpush1.bf16.msra.mxu0 0
    %182 = vmatprep.subr.bf16.mxu0 0
    %183 = vmatpush1.bf16.msra.mxu0 0
    %184 = vmatprep.subr.bf16.mxu0 0
    %185 = vmatpush1.bf16.msra.mxu0 0
    %186 = vmatprep.mubr.bf16.mxu0 0
    %187 = vmatmul.mubr.bf16.gmra.mrb[0].mxu0 %v152
    %v188 = vpop.f32.mrb[0].mxu0
    %v189 = vadd.f32 %v137, %v188
    %v190 = vpop.f32.mrb[0].mxu0
    %v191 = vpop.f32.mrb[0].mxu0
    %v192 = vadd.f32 %v137, %v191
    %v193 = vpop.f32.mrb[0].mxu0
    %194 = vdwg.mxu0
    %s195 = scalar_lea.vmem [#allocation5], 16
    %v196 = vld [vmem:[%s195] sm:$0xf]
    %v197 = vld [vmem:[%s195 + $0x4] sm:$0xf]
    %v198 = vld [vmem:[%s195 + $0x8] sm:$0xf]
    %v199 = vld [vmem:[%s195 + $0xc] sm:$0xf]
    %v200 = vld [vmem:[%s4 + $0x2] sm:$0x1]
    %v201 = vlaneseq
    %v202 = vshrl.u32 %v201, 7
    %v203 = vsub.s32 0, %v202
    %v204 = vrot.slane %v200, %v203
    %v209 = vunpack.c.l.b16 %v196
    %v210 = vunpack.c.l.b16 %v197
    %v211 = vunpack.c.l.b16 %v198
    %v212 = vunpack.c.l.b16 %v199
    %v213 = vpack.c.b16 %v210, %v209
    %v214 = vpack.c.b16 %v212, %v211
    %217 = vmatprep.subr.bf16.mxu0 0
    %218 = vmatpush1.bf16.msra.mxu0 %v213
    %219 = vmatprep.subr.bf16.mxu0 0
    %220 = vmatpush1.bf16.msra.mxu0 %v214
    %221 = vmatprep.subr.bf16.mxu0 0
    %222 = vmatpush1.bf16.msra.mxu0 0
    %223 = vmatprep.subr.bf16.mxu0 0
    %224 = vmatpush1.bf16.msra.mxu0 0
    %225 = vmatprep.subr.bf16.mxu0 0
    %226 = vmatpush1.bf16.msra.mxu0 0
    %227 = vmatprep.subr.bf16.mxu0 0
    %228 = vmatpush1.bf16.msra.mxu0 0
    %229 = vmatprep.subr.bf16.mxu0 0
    %230 = vmatpush1.bf16.msra.mxu0 0
    %231 = vmatprep.subr.bf16.mxu0 0
    %232 = vmatpush1.bf16.msra.mxu0 0
    %233 = vmatprep.subr.bf16.mxu0 0
    %234 = vmatpush1.bf16.msra.mxu0 0
    %235 = vmatprep.subr.bf16.mxu0 0
    %236 = vmatpush1.bf16.msra.mxu0 0
    %237 = vmatprep.subr.bf16.mxu0 0
    %238 = vmatpush1.bf16.msra.mxu0 0
    %239 = vmatprep.subr.bf16.mxu0 0
    %240 = vmatpush1.bf16.msra.mxu0 0
    %241 = vmatprep.subr.bf16.mxu0 0
    %242 = vmatpush1.bf16.msra.mxu0 0
    %243 = vmatprep.subr.bf16.mxu0 0
    %244 = vmatpush1.bf16.msra.mxu0 0
    %245 = vmatprep.subr.bf16.mxu0 0
    %246 = vmatpush1.bf16.msra.mxu0 0
    %247 = vmatprep.subr.bf16.mxu0 0
    %248 = vmatpush1.bf16.msra.mxu0 0
    %249 = vmatprep.mubr.bf16.mxu0 0
    %250 = vmatmul.mubr.bf16.gmra.mrb[0].mxu0 %v152
    %v251 = vpop.f32.mrb[0].mxu0
    %v252 = vadd.f32 %v204, %v251
    %v253 = vpop.f32.mrb[0].mxu0
    %v254 = vpop.f32.mrb[0].mxu0
    %v255 = vadd.f32 %v204, %v254
    %v256 = vpop.f32.mrb[0].mxu0
    %257 = vdwg.mxu0
    %s258 = scalar_lea.vmem [#allocation5], 32
    %v259 = vld [vmem:[%s258] sm:$0xf]
    %v260 = vld [vmem:[%s258 + $0x4] sm:$0xf]
    %v261 = vld [vmem:[%s258 + $0x8] sm:$0xf]
    %v262 = vld [vmem:[%s258 + $0xc] sm:$0xf]
    %v263 = vld [vmem:[%s4 + $0x3] sm:$0x1]
    %v264 = vlaneseq
    %v265 = vshrl.u32 %v264, 7
    %v266 = vsub.s32 0, %v265
    %v267 = vrot.slane %v263, %v266
    %v272 = vunpack.c.l.b16 %v259
    %v273 = vunpack.c.l.b16 %v260
    %v274 = vunpack.c.l.b16 %v261
    %v275 = vunpack.c.l.b16 %v262
    %v276 = vpack.c.b16 %v273, %v272
    %v277 = vpack.c.b16 %v275, %v274
    %280 = vmatprep.subr.bf16.mxu0 0
    %281 = vmatpush1.bf16.msra.mxu0 %v276
    %282 = vmatprep.subr.bf16.mxu0 0
    %283 = vmatpush1.bf16.msra.mxu0 %v277
    %284 = vmatprep.subr.bf16.mxu0 0
    %285 = vmatpush1.bf16.msra.mxu0 0
    %286 = vmatprep.subr.bf16.mxu0 0
    %287 = vmatpush1.bf16.msra.mxu0 0
    %288 = vmatprep.subr.bf16.mxu0 0
    %289 = vmatpush1.bf16.msra.mxu0 0
    %290 = vmatprep.subr.bf16.mxu0 0
    %291 = vmatpush1.bf16.msra.mxu0 0
    %292 = vmatprep.subr.bf16.mxu0 0
    %293 = vmatpush1.bf16.msra.mxu0 0
    %294 = vmatprep.subr.bf16.mxu0 0
    %295 = vmatpush1.bf16.msra.mxu0 0
    %296 = vmatprep.subr.bf16.mxu0 0
    %297 = vmatpush1.bf16.msra.mxu0 0
    %298 = vmatprep.subr.bf16.mxu0 0
    %299 = vmatpush1.bf16.msra.mxu0 0
    %300 = vmatprep.subr.bf16.mxu0 0
    %301 = vmatpush1.bf16.msra.mxu0 0
    %302 = vmatprep.subr.bf16.mxu0 0
    %303 = vmatpush1.bf16.msra.mxu0 0
    %304 = vmatprep.subr.bf16.mxu0 0
    %305 = vmatpush1.bf16.msra.mxu0 0
    %306 = vmatprep.subr.bf16.mxu0 0
    %307 = vmatpush1.bf16.msra.mxu0 0
    %308 = vmatprep.subr.bf16.mxu0 0
    %309 = vmatpush1.bf16.msra.mxu0 0
    %310 = vmatprep.subr.bf16.mxu0 0
    %311 = vmatpush1.bf16.msra.mxu0 0
    %312 = vmatprep.mubr.bf16.mxu0 0
    %313 = vmatmul.mubr.bf16.gmra.mrb[0].mxu0 %v152
    %v314 = vpop.f32.mrb[0].mxu0
    %v315 = vadd.f32 %v267, %v314
    %v316 = vpop.f32.mrb[0].mxu0
    %v317 = vpop.f32.mrb[0].mxu0
    %v318 = vadd.f32 %v267, %v317
    %v319 = vpop.f32.mrb[0].mxu0
    %320 = vdwg.mxu0
    %v321 = vpack.c.bf16 %v192, %v189
    %v322 = vpack.c.bf16 %v255, %v252
    %v324 = vsel %vm150, %v321, 0
    %v327 = vsel %vm150, %v322, 0
    %329 = vmatprep.subr.bf16.mxu0 0
    %330 = vmatpush1.bf16.xpose.msra.mxu0 %v327
    %331 = vmatprep.subr.bf16.mxu0 0
    %332 = vmatpush1.bf16.xpose.msra.mxu0 0
    %333 = vmatprep.subr.bf16.mxu0 0
    %334 = vmatpush1.bf16.xpose.msra.mxu0 0
    %335 = vmatprep.subr.bf16.mxu0 0
    %336 = vmatpush1.bf16.xpose.msra.mxu0 0
    %337 = vmatprep.subr.bf16.mxu0 0
    %338 = vmatpush1.bf16.xpose.msra.mxu0 0
    %339 = vmatprep.subr.bf16.mxu0 0
    %340 = vmatpush1.bf16.xpose.msra.mxu0 0
    %341 = vmatprep.subr.bf16.mxu0 0
    %342 = vmatpush1.bf16.xpose.msra.mxu0 0
    %343 = vmatprep.subr.bf16.mxu0 0
    %344 = vmatpush1.bf16.xpose.msra.mxu0 0
    %345 = vmatprep.subr.bf16.mxu0 0
    %346 = vmatpush1.bf16.xpose.msra.mxu0 0
    %347 = vmatprep.subr.bf16.mxu0 0
    %348 = vmatpush1.bf16.xpose.msra.mxu0 0
    %349 = vmatprep.subr.bf16.mxu0 0
    %350 = vmatpush1.bf16.xpose.msra.mxu0 0
    %351 = vmatprep.subr.bf16.mxu0 0
    %352 = vmatpush1.bf16.xpose.msra.mxu0 0
    %353 = vmatprep.subr.bf16.mxu0 0
    %354 = vmatpush1.bf16.xpose.msra.mxu0 0
    %355 = vmatprep.subr.bf16.mxu0 0
    %356 = vmatpush1.bf16.xpose.msra.mxu0 0
    %357 = vmatprep.subr.bf16.mxu0 0
    %358 = vmatpush1.bf16.xpose.msra.mxu0 0
    %359 = vmatprep.subr.bf16.mxu0 0
    %360 = vmatpush1.bf16.xpose.msra.mxu0 0
    %361 = vmatprep.mubr.bf16.mxu0 0
    %362 = vmatmul.mubr.bf16.gmra.mrb[0].mxu0 %v324
    %v363 = vpop.f32.mrb[0].mxu0
    %v364 = vadd.f32 %v126, %v363
    %v365 = vpop.f32.mrb[0].mxu0
    %v366 = vpop.f32.mrb[0].mxu0
    %v367 = vadd.f32 %v127, %v366
    %v368 = vpop.f32.mrb[0].mxu0
    %369 = vdwg.mxu0
    %vm370 = vcmask 130048
    %v371 = vsel %vm370, %v364, -inf
    %372 = vmax.xlane.f32.xlu0 %v371
    %v373 = vpop.xlane.xlu0 %372
    %v374 = vsel %vm370, %v367, -inf
    %375 = vmax.xlane.f32.xlu0 %v374
    %v376 = vpop.xlane.xlu0 %375
    %v377 = vsub.f32 %v364, %v373
    %v378 = vsub.f32 %v367, %v376
    %v379 = vmul.f32 %v377, 1.442695
    %v380 = vpow.pop %v379
    %v381 = vmul.f32 %v378, 1.442695
    %v382 = vpow.pop %v381
    %v383 = vsel %vm370, %v380, 0.0
    %384 = vadd.xlane.f32.xlu0 %v383
    %v385 = vpop.xlane.xlu0 %384
    %v386 = vsel %vm370, %v382, 0.0
    %387 = vadd.xlane.f32.xlu0 %v386
    %v388 = vpop.xlane.xlu0 %387
    %v389 = vrcp.pop %v385
    %v390 = vrcp.pop %v388
    %v391 = vmul.f32 %v380, %v389
    %v392 = vmul.f32 %v382, %v390
    %v393 = vpack.c.bf16 %v392, %v391
    %v394 = vpack.c.bf16 %v318, %v315
    %v396 = vsel %vm370, %v393, 0
    %398 = vmatprep.subr.bf16.mxu0 0
    %399 = vmatpush1.bf16.msra.mxu0 %v394
    %400 = vmatprep.subr.bf16.mxu0 0
    %401 = vmatpush1.bf16.msra.mxu0 0
    %402 = vmatprep.subr.bf16.mxu0 0
    %403 = vmatpush1.bf16.msra.mxu0 0
    %404 = vmatprep.subr.bf16.mxu0 0
    %405 = vmatpush1.bf16.msra.mxu0 0
    %406 = vmatprep.subr.bf16.mxu0 0
    %407 = vmatpush1.bf16.msra.mxu0 0
    %408 = vmatprep.subr.bf16.mxu0 0
    %409 = vmatpush1.bf16.msra.mxu0 0
    %410 = vmatprep.subr.bf16.mxu0 0
    %411 = vmatpush1.bf16.msra.mxu0 0
    %412 = vmatprep.subr.bf16.mxu0 0
    %413 = vmatpush1.bf16.msra.mxu0 0
    %414 = vmatprep.subr.bf16.mxu0 0
    %415 = vmatpush1.bf16.msra.mxu0 0
    %416 = vmatprep.subr.bf16.mxu0 0
    %417 = vmatpush1.bf16.msra.mxu0 0
    %418 = vmatprep.subr.bf16.mxu0 0
    %419 = vmatpush1.bf16.msra.mxu0 0
    %420 = vmatprep.subr.bf16.mxu0 0
    %421 = vmatpush1.bf16.msra.mxu0 0
    %422 = vmatprep.subr.bf16.mxu0 0
    %423 = vmatpush1.bf16.msra.mxu0 0
    %424 = vmatprep.subr.bf16.mxu0 0
    %425 = vmatpush1.bf16.msra.mxu0 0
    %426 = vmatprep.subr.bf16.mxu0 0
    %427 = vmatpush1.bf16.msra.mxu0 0
    %428 = vmatprep.subr.bf16.mxu0 0
    %429 = vmatpush1.bf16.msra.mxu0 0
    %430 = vmatprep.mubr.bf16.mxu0 0
    %431 = vmatmul.mubr.bf16.gmra.mrb[0].mxu0 %v396
    %v432 = vpop.f32.mrb[0].mxu0
    %v433 = vadd.f32 0.0, %v432
    %v434 = vpop.f32.mrb[0].mxu0
    %v435 = vpop.f32.mrb[0].mxu0
    %v436 = vadd.f32 0.0, %v435
    %v437 = vpop.f32.mrb[0].mxu0
    %438 = vdwg.mxu0
    %v439 = vpack.c.bf16 %v436, %v433
    %s440 = scalar_lea.vmem [#allocation5], 48
    %v441 = vld [vmem:[%s440] sm:$0xf]
    %v442 = vld [vmem:[%s440 + $0x4] sm:$0xf]
    %v443 = vld [vmem:[%s440 + $0x8] sm:$0xf]
    %v444 = vld [vmem:[%s440 + $0xc] sm:$0xf]
    %v445 = vld [vmem:[%s4 + $0x4] sm:$0x1]
    %v446 = vlaneseq
    %v447 = vshrl.u32 %v446, 7
    %v448 = vsub.s32 0, %v447
    %v449 = vrot.slane %v445, %v448
    %v454 = vunpack.c.l.b16 %v441
    %v455 = vunpack.c.l.b16 %v442
    %v456 = vunpack.c.l.b16 %v443
    %v457 = vunpack.c.l.b16 %v444
    %v458 = vpack.c.b16 %v455, %v454
    %v459 = vpack.c.b16 %v457, %v456
    %v463 = vsel %vm150, %v439, 0
    %465 = vmatprep.subr.bf16.mxu0 0
    %466 = vmatpush1.bf16.msra.mxu0 %v458
    %467 = vmatprep.subr.bf16.mxu0 0
    %468 = vmatpush1.bf16.msra.mxu0 %v459
    %469 = vmatprep.subr.bf16.mxu0 0
    %470 = vmatpush1.bf16.msra.mxu0 0
    %471 = vmatprep.subr.bf16.mxu0 0
    %472 = vmatpush1.bf16.msra.mxu0 0
    %473 = vmatprep.subr.bf16.mxu0 0
    %474 = vmatpush1.bf16.msra.mxu0 0
    %475 = vmatprep.subr.bf16.mxu0 0
    %476 = vmatpush1.bf16.msra.mxu0 0
    %477 = vmatprep.subr.bf16.mxu0 0
    %478 = vmatpush1.bf16.msra.mxu0 0
    %479 = vmatprep.subr.bf16.mxu0 0
    %480 = vmatpush1.bf16.msra.mxu0 0
    %481 = vmatprep.subr.bf16.mxu0 0
    %482 = vmatpush1.bf16.msra.mxu0 0
    %483 = vmatprep.subr.bf16.mxu0 0
    %484 = vmatpush1.bf16.msra.mxu0 0
    %485 = vmatprep.subr.bf16.mxu0 0
    %486 = vmatpush1.bf16.msra.mxu0 0
    %487 = vmatprep.subr.bf16.mxu0 0
    %488 = vmatpush1.bf16.msra.mxu0 0
    %489 = vmatprep.subr.bf16.mxu0 0
    %490 = vmatpush1.bf16.msra.mxu0 0
    %491 = vmatprep.subr.bf16.mxu0 0
    %492 = vmatpush1.bf16.msra.mxu0 0
    %493 = vmatprep.subr.bf16.mxu0 0
    %494 = vmatpush1.bf16.msra.mxu0 0
    %495 = vmatprep.subr.bf16.mxu0 0
    %496 = vmatpush1.bf16.msra.mxu0 0
    %497 = vmatprep.mubr.bf16.mxu0 0
    %498 = vmatmul.mubr.bf16.gmra.mrb[0].mxu0 %v463
    %v499 = vpop.f32.mrb[0].mxu0
    %v500 = vadd.f32 %v449, %v499
    %v501 = vpop.f32.mrb[0].mxu0
    %v502 = vpop.f32.mrb[0].mxu0
    %v503 = vadd.f32 %v449, %v502
    %v504 = vpop.f32.mrb[0].mxu0
    %505 = vdwg.mxu0
    %s506 = scalar_lea.vmem [#allocation5], 64
    %v507 = vld [vmem:[%s506] sm:$0xf]
    %v508 = vld [vmem:[%s506 + $0x4] sm:$0xf]
    %v509 = vld [vmem:[%s506 + $0x8] sm:$0xf]
    %v510 = vld [vmem:[%s506 + $0xc] sm:$0xf]
    %v511 = vld [vmem:[%s4 + $0x5] sm:$0x1]
    %v512 = vlaneseq
    %v513 = vshrl.u32 %v512, 7
    %v514 = vsub.s32 0, %v513
    %v515 = vrot.slane %v511, %v514
    %v520 = vunpack.c.l.b16 %v507
    %v521 = vunpack.c.l.b16 %v508
    %v522 = vunpack.c.l.b16 %v509
    %v523 = vunpack.c.l.b16 %v510
    %v524 = vpack.c.b16 %v521, %v520
    %v525 = vpack.c.b16 %v523, %v522
    %528 = vmatprep.subr.bf16.mxu0 0
    %529 = vmatpush1.bf16.msra.mxu0 %v524
    %530 = vmatprep.subr.bf16.mxu0 0
    %531 = vmatpush1.bf16.msra.mxu0 %v525
    %532 = vmatprep.subr.bf16.mxu0 0
    %533 = vmatpush1.bf16.msra.mxu0 0
    %534 = vmatprep.subr.bf16.mxu0 0
    %535 = vmatpush1.bf16.msra.mxu0 0
    %536 = vmatprep.subr.bf16.mxu0 0
    %537 = vmatpush1.bf16.msra.mxu0 0
    %538 = vmatprep.subr.bf16.mxu0 0
    %539 = vmatpush1.bf16.msra.mxu0 0
    %540 = vmatprep.subr.bf16.mxu0 0
    %541 = vmatpush1.bf16.msra.mxu0 0
    %542 = vmatprep.subr.bf16.mxu0 0
    %543 = vmatpush1.bf16.msra.mxu0 0
    %544 = vmatprep.subr.bf16.mxu0 0
    %545 = vmatpush1.bf16.msra.mxu0 0
    %546 = vmatprep.subr.bf16.mxu0 0
    %547 = vmatpush1.bf16.msra.mxu0 0
    %548 = vmatprep.subr.bf16.mxu0 0
    %549 = vmatpush1.bf16.msra.mxu0 0
    %550 = vmatprep.subr.bf16.mxu0 0
    %551 = vmatpush1.bf16.msra.mxu0 0
    %552 = vmatprep.subr.bf16.mxu0 0
    %553 = vmatpush1.bf16.msra.mxu0 0
    %554 = vmatprep.subr.bf16.mxu0 0
    %555 = vmatpush1.bf16.msra.mxu0 0
    %556 = vmatprep.subr.bf16.mxu0 0
    %557 = vmatpush1.bf16.msra.mxu0 0
    %558 = vmatprep.subr.bf16.mxu0 0
    %559 = vmatpush1.bf16.msra.mxu0 0
    %560 = vmatprep.mubr.bf16.mxu0 0
    %561 = vmatmul.mubr.bf16.gmra.mrb[0].mxu0 %v463
    %v562 = vpop.f32.mrb[0].mxu0
    %v563 = vadd.f32 %v515, %v562
    %v564 = vpop.f32.mrb[0].mxu0
    %v565 = vpop.f32.mrb[0].mxu0
    %v566 = vadd.f32 %v515, %v565
    %v567 = vpop.f32.mrb[0].mxu0
    %568 = vdwg.mxu0
    %s569 = scalar_lea.vmem [#allocation5], 80
    %v570 = vld [vmem:[%s569] sm:$0xf]
    %v571 = vld [vmem:[%s569 + $0x4] sm:$0xf]
    %v572 = vld [vmem:[%s569 + $0x8] sm:$0xf]
    %v573 = vld [vmem:[%s569 + $0xc] sm:$0xf]
    %v574 = vld [vmem:[%s4 + $0x6] sm:$0x1]
    %v575 = vlaneseq
    %v576 = vshrl.u32 %v575, 7
    %v577 = vsub.s32 0, %v576
    %v578 = vrot.slane %v574, %v577
    %v583 = vunpack.c.l.b16 %v570
    %v584 = vunpack.c.l.b16 %v571
    %v585 = vunpack.c.l.b16 %v572
    %v586 = vunpack.c.l.b16 %v573
    %v587 = vpack.c.b16 %v584, %v583
    %v588 = vpack.c.b16 %v586, %v585
    %591 = vmatprep.subr.bf16.mxu0 0
    %592 = vmatpush1.bf16.msra.mxu0 %v587
    %593 = vmatprep.subr.bf16.mxu0 0
    %594 = vmatpush1.bf16.msra.mxu0 %v588
    %595 = vmatprep.subr.bf16.mxu0 0
    %596 = vmatpush1.bf16.msra.mxu0 0
    %597 = vmatprep.subr.bf16.mxu0 0
    %598 = vmatpush1.bf16.msra.mxu0 0
    %599 = vmatprep.subr.bf16.mxu0 0
    %600 = vmatpush1.bf16.msra.mxu0 0
    %601 = vmatprep.subr.bf16.mxu0 0
    %602 = vmatpush1.bf16.msra.mxu0 0
    %603 = vmatprep.subr.bf16.mxu0 0
    %604 = vmatpush1.bf16.msra.mxu0 0
    %605 = vmatprep.subr.bf16.mxu0 0
    %606 = vmatpush1.bf16.msra.mxu0 0
    %607 = vmatprep.subr.bf16.mxu0 0
    %608 = vmatpush1.bf16.msra.mxu0 0
    %609 = vmatprep.subr.bf16.mxu0 0
    %610 = vmatpush1.bf16.msra.mxu0 0
    %611 = vmatprep.subr.bf16.mxu0 0
    %612 = vmatpush1.bf16.msra.mxu0 0
    %613 = vmatprep.subr.bf16.mxu0 0
    %614 = vmatpush1.bf16.msra.mxu0 0
    %615 = vmatprep.subr.bf16.mxu0 0
    %616 = vmatpush1.bf16.msra.mxu0 0
    %617 = vmatprep.subr.bf16.mxu0 0
    %618 = vmatpush1.bf16.msra.mxu0 0
    %619 = vmatprep.subr.bf16.mxu0 0
    %620 = vmatpush1.bf16.msra.mxu0 0
    %621 = vmatprep.subr.bf16.mxu0 0
    %622 = vmatpush1.bf16.msra.mxu0 0
    %623 = vmatprep.mubr.bf16.mxu0 0
    %624 = vmatmul.mubr.bf16.gmra.mrb[0].mxu0 %v463
    %v625 = vpop.f32.mrb[0].mxu0
    %v626 = vadd.f32 %v578, %v625
    %v627 = vpop.f32.mrb[0].mxu0
    %v628 = vpop.f32.mrb[0].mxu0
    %v629 = vadd.f32 %v578, %v628
    %v630 = vpop.f32.mrb[0].mxu0
    %631 = vdwg.mxu0
    %v632 = vpack.c.bf16 %v503, %v500
    %v633 = vpack.c.bf16 %v566, %v563
    %v635 = vsel %vm150, %v632, 0
    %v638 = vsel %vm150, %v633, 0
    %640 = vmatprep.subr.bf16.mxu0 0
    %641 = vmatpush1.bf16.xpose.msra.mxu0 %v638
    %642 = vmatprep.subr.bf16.mxu0 0
    %643 = vmatpush1.bf16.xpose.msra.mxu0 0
    %644 = vmatprep.subr.bf16.mxu0 0
    %645 = vmatpush1.bf16.xpose.msra.mxu0 0
    %646 = vmatprep.subr.bf16.mxu0 0
    %647 = vmatpush1.bf16.xpose.msra.mxu0 0
    %648 = vmatprep.subr.bf16.mxu0 0
    %649 = vmatpush1.bf16.xpose.msra.mxu0 0
    %650 = vmatprep.subr.bf16.mxu0 0
    %651 = vmatpush1.bf16.xpose.msra.mxu0 0
    %652 = vmatprep.subr.bf16.mxu0 0
    %653 = vmatpush1.bf16.xpose.msra.mxu0 0
    %654 = vmatprep.subr.bf16.mxu0 0
    %655 = vmatpush1.bf16.xpose.msra.mxu0 0
    %656 = vmatprep.subr.bf16.mxu0 0
    %657 = vmatpush1.bf16.xpose.msra.mxu0 0
    %658 = vmatprep.subr.bf16.mxu0 0
    %659 = vmatpush1.bf16.xpose.msra.mxu0 0
    %660 = vmatprep.subr.bf16.mxu0 0
    %661 = vmatpush1.bf16.xpose.msra.mxu0 0
    %662 = vmatprep.subr.bf16.mxu0 0
    %663 = vmatpush1.bf16.xpose.msra.mxu0 0
    %664 = vmatprep.subr.bf16.mxu0 0
    %665 = vmatpush1.bf16.xpose.msra.mxu0 0
    %666 = vmatprep.subr.bf16.mxu0 0
    %667 = vmatpush1.bf16.xpose.msra.mxu0 0
    %668 = vmatprep.subr.bf16.mxu0 0
    %669 = vmatpush1.bf16.xpose.msra.mxu0 0
    %670 = vmatprep.subr.bf16.mxu0 0
    %671 = vmatpush1.bf16.xpose.msra.mxu0 0
    %672 = vmatprep.mubr.bf16.mxu0 0
    %673 = vmatmul.mubr.bf16.gmra.mrb[0].mxu0 %v635
    %v674 = vpop.f32.mrb[0].mxu0
    %v675 = vadd.f32 %v126, %v674
    %v676 = vpop.f32.mrb[0].mxu0
    %v677 = vpop.f32.mrb[0].mxu0
    %v678 = vadd.f32 %v127, %v677
    %v679 = vpop.f32.mrb[0].mxu0
    %680 = vdwg.mxu0
    %v681 = vsel %vm370, %v675, -inf
    %682 = vmax.xlane.f32.xlu0 %v681
    %v683 = vpop.xlane.xlu0 %682
    %v684 = vsel %vm370, %v678, -inf
    %685 = vmax.xlane.f32.xlu0 %v684
    %v686 = vpop.xlane.xlu0 %685
    %v687 = vsub.f32 %v675, %v683
    %v688 = vsub.f32 %v678, %v686
    %v689 = vmul.f32 %v687, 1.442695
    %v690 = vpow.pop %v689
    %v691 = vmul.f32 %v688, 1.442695
    %v692 = vpow.pop %v691
    %v693 = vsel %vm370, %v690, 0.0
    %694 = vadd.xlane.f32.xlu0 %v693
    %v695 = vpop.xlane.xlu0 %694
    %v696 = vsel %vm370, %v692, 0.0
    %697 = vadd.xlane.f32.xlu0 %v696
    %v698 = vpop.xlane.xlu0 %697
    %v699 = vrcp.pop %v695
    %v700 = vrcp.pop %v698
    %v701 = vmul.f32 %v690, %v699
    %v702 = vmul.f32 %v692, %v700
    %v703 = vpack.c.bf16 %v702, %v701
    %v704 = vpack.c.bf16 %v629, %v626
    %v706 = vsel %vm370, %v703, 0
    %708 = vmatprep.subr.bf16.mxu0 0
    %709 = vmatpush1.bf16.msra.mxu0 %v704
    %710 = vmatprep.subr.bf16.mxu0 0
    %711 = vmatpush1.bf16.msra.mxu0 0
    %712 = vmatprep.subr.bf16.mxu0 0
    %713 = vmatpush1.bf16.msra.mxu0 0
    %714 = vmatprep.subr.bf16.mxu0 0
    %715 = vmatpush1.bf16.msra.mxu0 0
    %716 = vmatprep.subr.bf16.mxu0 0
    %717 = vmatpush1.bf16.msra.mxu0 0
    %718 = vmatprep.subr.bf16.mxu0 0
    %719 = vmatpush1.bf16.msra.mxu0 0
    %720 = vmatprep.subr.bf16.mxu0 0
    %721 = vmatpush1.bf16.msra.mxu0 0
    %722 = vmatprep.subr.bf16.mxu0 0
    %723 = vmatpush1.bf16.msra.mxu0 0
    %724 = vmatprep.subr.bf16.mxu0 0
    %725 = vmatpush1.bf16.msra.mxu0 0
    %726 = vmatprep.subr.bf16.mxu0 0
    %727 = vmatpush1.bf16.msra.mxu0 0
    %728 = vmatprep.subr.bf16.mxu0 0
    %729 = vmatpush1.bf16.msra.mxu0 0
    %730 = vmatprep.subr.bf16.mxu0 0
    %731 = vmatpush1.bf16.msra.mxu0 0
    %732 = vmatprep.subr.bf16.mxu0 0
    %733 = vmatpush1.bf16.msra.mxu0 0
    %734 = vmatprep.subr.bf16.mxu0 0
    %735 = vmatpush1.bf16.msra.mxu0 0
    %736 = vmatprep.subr.bf16.mxu0 0
    %737 = vmatpush1.bf16.msra.mxu0 0
    %738 = vmatprep.subr.bf16.mxu0 0
    %739 = vmatpush1.bf16.msra.mxu0 0
    %740 = vmatprep.mubr.bf16.mxu0 0
    %741 = vmatmul.mubr.bf16.gmra.mrb[0].mxu0 %v706
    %v742 = vpop.f32.mrb[0].mxu0
    %v743 = vadd.f32 0.0, %v742
    %v744 = vpop.f32.mrb[0].mxu0
    %v745 = vpop.f32.mrb[0].mxu0
    %v746 = vadd.f32 0.0, %v745
    %v747 = vpop.f32.mrb[0].mxu0
    %748 = vdwg.mxu0
    %v749 = vsel %vm150, %v743, 0.0
    %v750 = vsel %vm150, %v746, 0.0
    %v751 = vadd.f32 %v749, %v750
    %v752 = vrot.slane %v751, 4
    %v753 = vadd.f32 %v751, %v752
    %v754 = vrot.slane %v753, 2
    %v755 = vadd.f32 %v753, %v754
    %v756 = vrot.slane %v755, 1
    %v757 = vadd.f32 %v755, %v756
    %v758 = vld [vmem:[%s4 + $0x7] sm:$0x1]
    %v759 = vpack.c.bf16 %v757, %v757
    %v760 = vld [vmem:[%s3] sm:$0xf]
    %v761 = vld [vmem:[%s3 + $0x4] sm:$0xf]
    %v762 = vld [vmem:[%s3 + $0x8] sm:$0xf]
    %v763 = vld [vmem:[%s3 + $0xc] sm:$0xf]
    %v768 = vunpack.c.l.b16 %v760
    %v769 = vunpack.c.l.b16 %v761
    %v770 = vunpack.c.l.b16 %v762
    %v771 = vunpack.c.l.b16 %v763
    %v772 = vpack.c.b16 %v769, %v768
    %v773 = vpack.c.b16 %v771, %v770
    %v777 = vsel %vm150, %v759, 0
    %779 = vmatprep.subr.bf16.mxu0 0
    %780 = vmatpush1.bf16.msra.mxu0 %v772
    %781 = vmatprep.subr.bf16.mxu0 0
    %782 = vmatpush1.bf16.msra.mxu0 %v773
    %783 = vmatprep.subr.bf16.mxu0 0
    %784 = vmatpush1.bf16.msra.mxu0 0
    %785 = vmatprep.subr.bf16.mxu0 0
    %786 = vmatpush1.bf16.msra.mxu0 0
    %787 = vmatprep.subr.bf16.mxu0 0
    %788 = vmatpush1.bf16.msra.mxu0 0
    %789 = vmatprep.subr.bf16.mxu0 0
    %790 = vmatpush1.bf16.msra.mxu0 0
    %791 = vmatprep.subr.bf16.mxu0 0
    %792 = vmatpush1.bf16.msra.mxu0 0
    %793 = vmatprep.subr.bf16.mxu0 0
    %794 = vmatpush1.bf16.msra.mxu0 0
    %795 = vmatprep.subr.bf16.mxu0 0
    %796 = vmatpush1.bf16.msra.mxu0 0
    %797 = vmatprep.subr.bf16.mxu0 0
    %798 = vmatpush1.bf16.msra.mxu0 0
    %799 = vmatprep.subr.bf16.mxu0 0
    %800 = vmatpush1.bf16.msra.mxu0 0
    %801 = vmatprep.subr.bf16.mxu0 0
    %802 = vmatpush1.bf16.msra.mxu0 0
    %803 = vmatprep.subr.bf16.mxu0 0
    %804 = vmatpush1.bf16.msra.mxu0 0
    %805 = vmatprep.subr.bf16.mxu0 0
    %806 = vmatpush1.bf16.msra.mxu0 0
    %807 = vmatprep.subr.bf16.mxu0 0
    %808 = vmatpush1.bf16.msra.mxu0 0
    %809 = vmatprep.subr.bf16.mxu0 0
    %810 = vmatpush1.bf16.msra.mxu0 0
    %811 = vmatprep.mubr.bf16.mxu0 0
    %812 = vmatmul.mubr.bf16.gmra.mrb[0].mxu0 %v777
    %v813 = vpop.f32.mrb[0].mxu0
    %v814 = vadd.f32 %v758, %v813
    %v815 = vpop.f32.mrb[0].mxu0
    %v816 = vpop.f32.mrb[0].mxu0
    %v817 = vpop.f32.mrb[0].mxu0
    %818 = vdwg.mxu0
    %819 = vst [vmem:[#allocation8] sm:$0x1] %v814
    // Predicated region
    $region38: #{tpu_custom_call.1} parent=1 // pred_check
      _
    $region39: #{tpu_custom_call.1} parent=1 // pred_check_branch
      %821 = sbr.rel (0) target = $region41
    $region40: #{tpu_custom_call.1} parent=1 // pred_region
      %s823 = ssub.s32 16, 16
      %824 = vsyncadd [#allocation4], %s823
      %s826 = sshll.u32 [#allocation8], 4
      %s827 = int_to_ptr.vmem [resolvable:$true] %s826
      %829 = dma.vmem_to_hbm [thread:$0]  %s827, 16, %s6, [#allocation4]
    $region41: #{tpu_custom_call.1} parent=1 // pred_fallthru
      _
    // Predicated region
    $region42: #{tpu_custom_call.1} parent=1 // pred_check
      _
    $region43: #{tpu_custom_call.1} parent=1 // pred_check_branch
      %831 = sbr.rel (0) target = $region45
    $region44: #{tpu_custom_call.1} parent=1 // pred_region
      %832 = dma.done [#allocation4], 16
    $region45: #{tpu_custom_call.1} parent=1 // pred_fallthru
      _
    %833 = vsyncpa [#allocation3], 1
    %834 = vsyncpa [#allocation6], 1
    %835 = vsyncpa [#allocation4], 1

</llo_original>
